<compile_context>
chip_gen: v6e
topology: v6e:2x2x1
jax: 0.10.0
libtpu: 0.0.40
codegen_flags: <defaults>
</compile_context>

<pallas_src>
from functools import partial

import jax
import jax.numpy as jnp
from jax.experimental import pallas as pl
from jax.experimental.pallas import tpu as pltpu


def fuse_block_kernel(rgb_ref, t_ref, pool_ref, ecat_ref, waug_ref, fhw_ref,
                      out_ref, *, H, W):
    Bblk, C, HW = rgb_ref.shape
    BC = Bblk * C
    f32 = jnp.float32
    bf16 = jnp.bfloat16
    sigmoid = jax.nn.sigmoid

    # ---- H-pool + W-pool, both branches, all batch rows: ONE bf16 MXU matmul ----
    rgb_flat = rgb_ref[...].reshape(BC, HW)                 # (BC, HW) lane-dense
    t_flat = t_ref[...].reshape(BC, HW)
    stacked = jnp.concatenate([rgb_flat, t_flat], axis=0).astype(bf16)   # (2BC, HW)
    pooled = jnp.dot(stacked, pool_ref[...],
                     preferred_element_type=f32)            # (2BC, H+W) f32

    ones_row = jnp.ones((1, H + W), bf16)                   # bias-fold row

    # Loop-invariant quadrant mask: rows < 2C keep the H columns (s_h logits),
    # rows >= 2C keep the W columns (s_w logits).
    row = jax.lax.broadcasted_iota(jnp.int32, (4 * C, H + W), 0)
    col = jax.lax.broadcasted_iota(jnp.int32, (4 * C, H + W), 1)
    quad = (row < 2 * C) == (col < H)

    waug = waug_ref[...]                                    # (2Cr, 2C+1) bf16
    fhw = fhw_ref[...]                                      # (4C, 2Cr)   bf16
    ecat = ecat_ref[...]                                    # (H+W, HW)   bf16

    # Static per-batch loop (Bblk is tiny); every slice is sublane-aligned
    # (C % 8 == 0) so there are no transposes / relayouts.
    for b in range(Bblk):
        rgb_pool_b = pooled[b * C:(b + 1) * C, :]                     # (C, H+W)
        t_pool_b = pooled[BC + b * C:BC + (b + 1) * C, :]             # (C, H+W)
        cat_aug = jnp.concatenate([rgb_pool_b.astype(bf16),
                                   t_pool_b.astype(bf16),
                                   ones_row], axis=0)                 # (2C+1, H+W)

        # fused 1x1 convs (block-diag branches, BN scale+shift folded) + SiLU
        y = jnp.dot(waug, cat_aug, preferred_element_type=f32)        # (2Cr, H+W)
        y = y * sigmoid(y)                                            # SiLU (f32)

        # fused F_h / F_w for both branches in ONE matmul; the unused quadrants
        # are zeroed before the expansion matmul instead of slicing y.
        full = jnp.dot(fhw, y.astype(bf16),
                       preferred_element_type=f32)                    # (4C, H+W)
        gates = jnp.where(quad, sigmoid(full), 0.0).astype(bf16)

        # expand s_h over W and s_w over H via one one-hot matmul -> lane-dense HW
        exp = jnp.dot(gates, ecat, preferred_element_type=f32)        # (4C, HW)
        gate = (exp[:C] * exp[2 * C:3 * C]            # rgb: s_h * s_w
                + exp[C:2 * C] * exp[3 * C:])         # t:   s_h * s_w

        # final fuse: lane-dense f32 VPU FMA, unmasked store
        out_ref[b, :, :] = (rgb_flat[b * C:(b + 1) * C, :] * gate
                            + t_flat[b * C:(b + 1) * C, :]).astype(out_ref.dtype)


def _num_tensorcores():
    """TensorCores sharing a 'parallel' Pallas grid on this chip (1 on v5e/v6e)."""
    try:
        kind = jax.devices()[0].device_kind.lower()
    except Exception:
        return 1
    single_tc = ("v5e", "v5 lite", "v5lite", "v6e", "v6 lite", "v6lite", "v2", "v3")
    if any(s in kind for s in single_tc):
        return 1
    return 2   # v7x (and megacore v4 / v5p)


@partial(jax.jit, static_argnames=("b_block",))
def _fuse_block_ca_v3_impl(rgb, t, params, b_block):
    B, C, H, W = rgb.shape
    HW = H * W
    Cr = params["w1"].shape[0]
    f32 = jnp.float32
    bf16 = jnp.bfloat16
    dtype = rgb.dtype

    # lane/sublane alignment required by the flattened unmasked-store layout
    assert HW % 128 == 0, "H*W must be a multiple of 128 (lane-dense layout)"
    assert C % 8 == 0, "C must be a multiple of 8 (sublane-aligned batch slices)"
    assert B % b_block == 0

    rgb_f = rgb.reshape(B, C, HW)
    t_f = t.reshape(B, C, HW)

    # --- constants (built under jit: no stray per-call dispatches) ---
    flat = jnp.arange(HW, dtype=jnp.int32)
    h_idx = flat // W
    w_idx = flat % W

    # pooling matrix (HW, H+W): first H cols = mean over W, last W cols = mean over H
    col = jnp.arange(H + W, dtype=jnp.int32)
    pool = ((col[None, :] == h_idx[:, None]).astype(f32) / W
            + (col[None, :] == (H + w_idx[:, None])).astype(f32) / H).astype(bf16)

    # one-hot expansion matrix (H+W, HW): rows 0..H-1 expand s_h, rows H.. expand s_w
    e_h = (jnp.arange(H, dtype=jnp.int32)[:, None] == h_idx[None, :]).astype(bf16)
    e_w = (jnp.arange(W, dtype=jnp.int32)[:, None] == w_idx[None, :]).astype(bf16)
    ecat = jnp.concatenate([e_h, e_w], axis=0)

    # fused 1x1-conv weights: block-diag over branches, BN folded into the rgb rows,
    # BN shift folded in as an extra column hit by an in-kernel ones row.
    w1f = params["bn_scale"] * params["w1"]                             # (Cr, C)
    zc = jnp.zeros((Cr, C), f32)
    zb = jnp.zeros((Cr, 1), f32)
    waug = jnp.concatenate(
        [jnp.concatenate([w1f, zc, params["bn_shift"]], axis=1),
         jnp.concatenate([zc, params["w2"], zb], axis=1)],
        axis=0).astype(bf16)                                            # (2Cr, 2C+1)

    # fused F_h / F_w weights, both branches: (4C, 2Cr)
    zf = jnp.zeros((C, Cr), f32)
    fhw = jnp.concatenate(
        [jnp.concatenate([params["fh1"], zf], axis=1),
         jnp.concatenate([zf, params["fh2"]], axis=1),
         jnp.concatenate([params["fw1"], zf], axis=1),
         jnp.concatenate([zf, params["fw2"]], axis=1)],
        axis=0).astype(bf16)

    grid = (B // b_block,)
    batch_spec = pl.BlockSpec((b_block, C, HW), lambda i: (i, 0, 0))

    def const2d(arr):
        # TODO(synk): pipeline_mode=pl.Buffered(1) would skip double-buffering
        # these never-changing operands at production sizes.
        return pl.BlockSpec(arr.shape, lambda i: (0, 0))

    out = pl.pallas_call(
        partial(fuse_block_kernel, H=H, W=W),
        out_shape=jax.ShapeDtypeStruct((B, C, HW), dtype),
        grid_spec=pltpu.PrefetchScalarGridSpec(
            num_scalar_prefetch=0,
            grid=grid,
            in_specs=[batch_spec, batch_spec, const2d(pool), const2d(ecat),
                      const2d(waug), const2d(fhw)],
            out_specs=pl.BlockSpec((b_block, C, HW), lambda i: (i, 0, 0)),
        ),
        compiler_params=pltpu.CompilerParams(
            dimension_semantics=("parallel",)),
    )(rgb_f, t_f, pool, ecat, waug, fhw)

    return out.reshape(B, C, H, W)


def fuse_block_ca_v3(rgb, t, params, b_block=None):
    B = rgb.shape[0]
    if b_block is None:
        ntc = _num_tensorcores()
        b_block = B // ntc if (ntc > 1 and B % ntc == 0) else B
    return _fuse_block_ca_v3_impl(rgb, t, params, b_block=b_block)


def reference(rgb, t, p):
    """Pure-JAX f32 reference of the PyTorch forward pass (eval-mode BN)."""
    sigmoid = jax.nn.sigmoid
    silu = lambda x: x * sigmoid(x)
    B, C, H, W = rgb.shape

    rgb_h = jnp.mean(rgb, axis=3)                        # (B, C, H)
    rgb_w = jnp.mean(rgb, axis=2)                        # (B, C, W)
    cat = jnp.concatenate([rgb_h, rgb_w], axis=2)        # (B, C, H+W)
    y1 = jnp.einsum("rc,bcp->brp", p["w1"], cat)         # (B, Cr, H+W)
    y1 = y1 * p["bn_scale"][None] + p["bn_shift"][None]
    y1 = silu(y1)
    rgb_s_h = sigmoid(jnp.einsum("cr,brh->bch", p["fh1"], y1[:, :, :H]))
    rgb_s_w = sigmoid(jnp.einsum("cr,brw->bcw", p["fw1"], y1[:, :, H:]))

    t_h = jnp.mean(t, axis=3)
    t_w = jnp.mean(t, axis=2)
    catt = jnp.concatenate([t_h, t_w], axis=2)
    y2 = silu(jnp.einsum("rc,bcp->brp", p["w2"], catt))  # bn2 unused in forward
    t_s_h = sigmoid(jnp.einsum("cr,brh->bch", p["fh2"], y2[:, :, :H]))
    t_s_w = sigmoid(jnp.einsum("cr,brw->bcw", p["fw2"], y2[:, :, H:]))

    gate = (rgb_s_h[:, :, :, None] * rgb_s_w[:, :, None, :]
            + t_s_h[:, :, :, None] * t_s_w[:, :, None, :])
    return rgb * gate + t


def make_params(key, C, reduction=16):
    Cr = C // reduction
    ks = jax.random.split(key, 6)
    p = {
        "w1": jax.random.normal(ks[0], (Cr, C), jnp.float32) * 0.1,
        "w2": jax.random.normal(ks[1], (Cr, C), jnp.float32) * 0.1,
        "fh1": jax.random.normal(ks[2], (C, Cr), jnp.float32) * 0.1,
        "fw1": jax.random.normal(ks[3], (C, Cr), jnp.float32) * 0.1,
        "fh2": jax.random.normal(ks[4], (C, Cr), jnp.float32) * 0.1,
        "fw2": jax.random.normal(ks[5], (C, Cr), jnp.float32) * 0.1,
    }
    # Deterministic (non-trivial) BatchNorm eval-mode parameters, folded:
    eps = 1e-5
    gamma = 1.0 + 0.1 * jnp.arange(Cr, dtype=jnp.float32)
    beta = 0.05 * jnp.arange(Cr, dtype=jnp.float32)
    run_mean = 0.02 * jnp.arange(Cr, dtype=jnp.float32)
    run_var = 1.0 + 0.1 * jnp.arange(Cr, dtype=jnp.float32)
    scale = gamma / jnp.sqrt(run_var + eps)
    shift = beta - run_mean * scale
    p["bn_scale"] = scale.reshape(Cr, 1)
    p["bn_shift"] = shift.reshape(Cr, 1)
    return p


if __name__ == "__main__":
    B, C, H, W = 2, 32, 16, 16
    reduction = 16

    key = jax.random.PRNGKey(0)
    k_rgb, k_t, k_p = jax.random.split(key, 3)
    rgb = jax.random.normal(k_rgb, (B, C, H, W), jnp.float32)
    t = jax.random.normal(k_t, (B, C, H, W), jnp.float32)
    params = make_params(k_p, C, reduction)

    out = jax.block_until_ready(fuse_block_ca_v3(rgb, t, params))
    ref = jax.block_until_ready(reference(rgb, t, params))

    assert out.shape == (B, C, H, W)
    assert out.dtype == rgb.dtype
    # bf16 MXU operands (per perf review) introduce ~1e-3 rounding on the sigmoid
    # gate; structural bugs would be O(1), so this tolerance still catches them.
    assert jnp.allclose(out, ref, atol=2e-2, rtol=2e-2), (
        f"max abs err {jnp.max(jnp.abs(out - ref))}")

    print("KERNEL_OK")
</pallas_src>

<mosaic_0001>
module attributes {stable_mosaic.version = 11 : i64} {
  func.func @fuse_block_kernel(%arg0: i32, %arg1: memref<1x32x256xf32, #tpu.memory_space<vmem>>, %arg2: memref<1x32x256xf32, #tpu.memory_space<vmem>>, %arg3: memref<256x32xbf16, #tpu.memory_space<vmem>>, %arg4: memref<32x256xbf16, #tpu.memory_space<vmem>>, %arg5: memref<4x65xbf16, #tpu.memory_space<vmem>>, %arg6: memref<128x4xbf16, #tpu.memory_space<vmem>>, %arg7: memref<1x32x256xf32, #tpu.memory_space<vmem>>) attributes {dimension_semantics = [#tpu.dimension_semantics<parallel>], iteration_bounds = array<i64: 2>, scalar_prefetch = 0 : i64, scratch_operands = 0 : i64, tpu.core_type = #tpu.core_type<tc>, window_params = [{transform_indices = @transform_0, window_bounds = array<i64: 1, 32, 256>}, {transform_indices = @transform_1, window_bounds = array<i64: 1, 32, 256>}, {pipeline_mode = #tpu.pipeline_mode<synchronous>, transform_indices = @transform_2, window_bounds = array<i64: 256, 32>}, {pipeline_mode = #tpu.pipeline_mode<synchronous>, transform_indices = @transform_3, window_bounds = array<i64: 32, 256>}, {pipeline_mode = #tpu.pipeline_mode<synchronous>, transform_indices = @transform_4, window_bounds = array<i64: 4, 65>}, {pipeline_mode = #tpu.pipeline_mode<synchronous>, transform_indices = @transform_5, window_bounds = array<i64: 128, 4>}, {transform_indices = @transform_6, window_bounds = array<i64: 1, 32, 256>}]} {
    %c0 = arith.constant 0 : index
    %c0_0 = arith.constant 0 : index
    %c0_1 = arith.constant 0 : index
    %0 = vector.load %arg1[%c0, %c0_0, %c0_1] : memref<1x32x256xf32, #tpu.memory_space<vmem>>, vector<1x32x256xf32>
    %1 = vector.shape_cast %0 : vector<1x32x256xf32> to vector<32x256xf32>
    %c0_2 = arith.constant 0 : index
    %c0_3 = arith.constant 0 : index
    %c0_4 = arith.constant 0 : index
    %2 = vector.load %arg2[%c0_2, %c0_3, %c0_4] : memref<1x32x256xf32, #tpu.memory_space<vmem>>, vector<1x32x256xf32>
    %3 = vector.shape_cast %2 : vector<1x32x256xf32> to vector<32x256xf32>
    %4 = tpu.concatenate %1, %3 in 0 : vector<32x256xf32>, vector<32x256xf32> -> vector<64x256xf32>
    %5 = arith.truncf %4 : vector<64x256xf32> to vector<64x256xbf16>
    %c0_5 = arith.constant 0 : index
    %c0_6 = arith.constant 0 : index
    %6 = vector.load %arg3[%c0_5, %c0_6] : memref<256x32xbf16, #tpu.memory_space<vmem>>, vector<256x32xbf16>
    %cst = arith.constant dense<0.000000e+00> : vector<64x32xf32>
    %7 = tpu.matmul %5, %6, %cst {dimension_numbers = #tpu.dot_dimension_numbers<[1], [0], [0], [1], [0, 0, 1, 1], [], []>} : vector<64x256xbf16>, vector<256x32xbf16>, vector<64x32xf32> -> vector<64x32xf32>
    %cst_7 = arith.constant 1.000000e+00 : bf16
    %8 = vector.broadcast %cst_7 : bf16 to vector<1x32xbf16>
    %9 = tpu.iota {dimensions = array<i32: 0>} : vector<128x32xi32>
    %10 = tpu.iota {dimensions = array<i32: 1>} : vector<128x32xi32>
    %c64_i32 = arith.constant 64 : i32
    %11 = vector.broadcast %c64_i32 : i32 to vector<128x32xi32>
    %12 = arith.cmpi slt, %9, %11 : vector<128x32xi32>
    %c16_i32 = arith.constant 16 : i32
    %13 = vector.broadcast %c16_i32 : i32 to vector<128x32xi32>
    %14 = arith.cmpi slt, %10, %13 : vector<128x32xi32>
    %15 = arith.xori %12, %14 : vector<128x32xi1>
    %cst_8 = arith.constant dense<true> : vector<128x32xi1>
    %16 = arith.xori %15, %cst_8 : vector<128x32xi1>
    %c0_9 = arith.constant 0 : index
    %c0_10 = arith.constant 0 : index
    %17 = vector.load %arg5[%c0_9, %c0_10] : memref<4x65xbf16, #tpu.memory_space<vmem>>, vector<4x65xbf16>
    %c0_11 = arith.constant 0 : index
    %c0_12 = arith.constant 0 : index
    %18 = vector.load %arg6[%c0_11, %c0_12] : memref<128x4xbf16, #tpu.memory_space<vmem>>, vector<128x4xbf16>
    %c0_13 = arith.constant 0 : index
    %c0_14 = arith.constant 0 : index
    %19 = vector.load %arg4[%c0_13, %c0_14] : memref<32x256xbf16, #tpu.memory_space<vmem>>, vector<32x256xbf16>
    %20 = vector.extract_strided_slice %7 {offsets = [0, 0], sizes = [32, 32], strides = [1, 1]} : vector<64x32xf32> to vector<32x32xf32>
    %21 = vector.extract_strided_slice %7 {offsets = [32, 0], sizes = [32, 32], strides = [1, 1]} : vector<64x32xf32> to vector<32x32xf32>
    %22 = arith.truncf %20 : vector<32x32xf32> to vector<32x32xbf16>
    %23 = arith.truncf %21 : vector<32x32xf32> to vector<32x32xbf16>
    %24 = tpu.concatenate %22, %23, %8 in 0 : vector<32x32xbf16>, vector<32x32xbf16>, vector<1x32xbf16> -> vector<65x32xbf16>
    %cst_15 = arith.constant dense<0.000000e+00> : vector<4x32xf32>
    %25 = tpu.matmul %17, %24, %cst_15 {dimension_numbers = #tpu.dot_dimension_numbers<[1], [0], [0], [1], [0, 0, 1, 1], [], []>} : vector<4x65xbf16>, vector<65x32xbf16>, vector<4x32xf32> -> vector<4x32xf32>
    %26 = arith.negf %25 : vector<4x32xf32>
    %27 = math.exp %26 : vector<4x32xf32>
    %cst_16 = arith.constant 1.000000e+00 : f32
    %28 = vector.broadcast %cst_16 : f32 to vector<4x32xf32>
    %29 = arith.addf %28, %27 : vector<4x32xf32>
    %30 = arith.divf %28, %29 : vector<4x32xf32>
    %31 = arith.mulf %25, %30 : vector<4x32xf32>
    %32 = arith.truncf %31 : vector<4x32xf32> to vector<4x32xbf16>
    %cst_17 = arith.constant dense<0.000000e+00> : vector<128x32xf32>
    %33 = tpu.matmul %18, %32, %cst_17 {dimension_numbers = #tpu.dot_dimension_numbers<[1], [0], [0], [1], [0, 0, 1, 1], [], []>} : vector<128x4xbf16>, vector<4x32xbf16>, vector<128x32xf32> -> vector<128x32xf32>
    %34 = arith.negf %33 : vector<128x32xf32>
    %35 = math.exp %34 : vector<128x32xf32>
    %cst_18 = arith.constant 1.000000e+00 : f32
    %36 = vector.broadcast %cst_18 : f32 to vector<128x32xf32>
    %37 = arith.addf %36, %35 : vector<128x32xf32>
    %38 = arith.divf %36, %37 : vector<128x32xf32>
    %cst_19 = arith.constant 0.000000e+00 : f32
    %39 = vector.broadcast %cst_19 : f32 to vector<128x32xf32>
    %40 = arith.select %16, %38, %39 : vector<128x32xi1>, vector<128x32xf32>
    %41 = arith.truncf %40 : vector<128x32xf32> to vector<128x32xbf16>
    %cst_20 = arith.constant dense<0.000000e+00> : vector<128x256xf32>
    %42 = tpu.matmul %41, %19, %cst_20 {dimension_numbers = #tpu.dot_dimension_numbers<[1], [0], [0], [1], [0, 0, 1, 1], [], []>} : vector<128x32xbf16>, vector<32x256xbf16>, vector<128x256xf32> -> vector<128x256xf32>
    %43 = vector.extract_strided_slice %42 {offsets = [0, 0], sizes = [32, 256], strides = [1, 1]} : vector<128x256xf32> to vector<32x256xf32>
    %44 = vector.extract_strided_slice %42 {offsets = [64, 0], sizes = [32, 256], strides = [1, 1]} : vector<128x256xf32> to vector<32x256xf32>
    %45 = arith.mulf %43, %44 : vector<32x256xf32>
    %46 = vector.extract_strided_slice %42 {offsets = [32, 0], sizes = [32, 256], strides = [1, 1]} : vector<128x256xf32> to vector<32x256xf32>
    %47 = vector.extract_strided_slice %42 {offsets = [96, 0], sizes = [32, 256], strides = [1, 1]} : vector<128x256xf32> to vector<32x256xf32>
    %48 = arith.mulf %46, %47 : vector<32x256xf32>
    %49 = arith.addf %45, %48 : vector<32x256xf32>
    %50 = arith.mulf %1, %49 : vector<32x256xf32>
    %51 = arith.addf %50, %3 : vector<32x256xf32>
    %c0_21 = arith.constant 0 : index
    %c0_22 = arith.constant 0 : index
    %c0_23 = arith.constant 0 : index
    %52 = vector.load %arg7[%c0_21, %c0_22, %c0_23] : memref<1x32x256xf32, #tpu.memory_space<vmem>>, vector<1x32x256xf32>
    %53 = vector.shape_cast %52 : vector<1x32x256xf32> to vector<32x256xf32>
    %54 = vector.shape_cast %51 : vector<32x256xf32> to vector<1x32x256xf32>
    tpu.vector_store %arg7[%c0_21, %c0_22, %c0_23], %54 {strides = array<i32>} : memref<1x32x256xf32, #tpu.memory_space<vmem>>, vector<1x32x256xf32>,
    return
  }
  func.func @transform_0(%arg0: i32) -> (i32, i32, i32) {
    %c0_i32 = arith.constant 0 : i32
    %c0_i32_0 = arith.constant 0 : i32
    %c0_i32_1 = arith.constant 0 : i32
    return %arg0, %c0_i32, %c0_i32_0 : i32, i32, i32
  }
  func.func @transform_1(%arg0: i32) -> (i32, i32, i32) {
    %c0_i32 = arith.constant 0 : i32
    %c0_i32_0 = arith.constant 0 : i32
    %c0_i32_1 = arith.constant 0 : i32
    return %arg0, %c0_i32, %c0_i32_0 : i32, i32, i32
  }
  func.func @transform_2(%arg0: i32) -> (i32, i32) {
    %c0_i32 = arith.constant 0 : i32
    %c0_i32_0 = arith.constant 0 : i32
    %c0_i32_1 = arith.constant 0 : i32
    return %c0_i32, %c0_i32_0 : i32, i32
  }
  func.func @transform_3(%arg0: i32) -> (i32, i32) {
    %c0_i32 = arith.constant 0 : i32
    %c0_i32_0 = arith.constant 0 : i32
    %c0_i32_1 = arith.constant 0 : i32
    return %c0_i32, %c0_i32_0 : i32, i32
  }
  func.func @transform_4(%arg0: i32) -> (i32, i32) {
    %c0_i32 = arith.constant 0 : i32
    %c0_i32_0 = arith.constant 0 : i32
    %c0_i32_1 = arith.constant 0 : i32
    return %c0_i32, %c0_i32_0 : i32, i32
  }
  func.func @transform_5(%arg0: i32) -> (i32, i32) {
    %c0_i32 = arith.constant 0 : i32
    %c0_i32_0 = arith.constant 0 : i32
    %c0_i32_1 = arith.constant 0 : i32
    return %c0_i32, %c0_i32_0 : i32, i32
  }
  func.func @transform_6(%arg0: i32) -> (i32, i32, i32) {
    %c0_i32 = arith.constant 0 : i32
    %c0_i32_0 = arith.constant 0 : i32
    %c0_i32_1 = arith.constant 0 : i32
    return %arg0, %c0_i32, %c0_i32_0 : i32, i32, i32
  }
}

</mosaic_0001>

<llo_original>
// kernel: _fuse_block_ca_v3_impl.1
$region0: #{_fuse_block_ca_v3_impl.1}
  #allocation0 [shape = 'u32[]', space=smem, size = 0x4, offset = 0x4, fixed_abs, tag = 'smem constant byte address 0x4 - core index']
  #allocation1 [shape = 'u32[144,128]{1,0:T(1,128)}', space=vmem, size = 0x12000, scoped, tag = 'internal scratch']
  %s0 = inlined_call_operand.vmem [shape: f32[2,32,256], index: 0, kind: input, shape index: {}]
  %s1 = inlined_call_operand.vmem [shape: f32[2,32,256], index: 1, kind: input, shape index: {}]
  %s2 = inlined_call_operand.vmem [shape: bf16[256,32], index: 2, kind: input, shape index: {}]
  %s3 = inlined_call_operand.vmem [shape: bf16[32,256], index: 3, kind: input, shape index: {}]
  %s4 = inlined_call_operand.vmem [shape: bf16[4,65], index: 4, kind: input, shape index: {}]
  %s5 = inlined_call_operand.vmem [shape: bf16[128,4], index: 5, kind: input, shape index: {}]
  %s6 = inlined_call_operand.vmem [shape: f32[2,32,256], index: 6, kind: output, shape index: {}]
  %s7 = sld [smem:[#allocation0]]
  $region57: #{_fuse_block_ca_v3_impl.1} parent=0
    _
  %s9 = ssub.s32 1, %s7
  %s10 = scalar_select 0, %s9, %s7
  loop: start=0, step=1, limit=4
  $region2: #{_fuse_block_ca_v3_impl.1} parent=0 // loop_pre_header
    _
  $region3: #{_fuse_block_ca_v3_impl.1} parent=0 // loop_header
    %s12 = sphi 0, %s16
    %p13 = scmp.ge.s32.totalorder %s12, 4
    %s22 = sphi 0, %s24
    %s25 = sphi 0, %s22
    %s26 = sphi 0, %s25
    %s42 = sphi 0, %s26
    %s48 = sphi 0, %s50
    %s51 = sphi 0, %s48
    %s52 = sphi 0, %s51
    %s68 = sphi 0, %s52
    %s72 = sphi 0, %s72
    %s74 = sphi 0, %s72
    %s75 = sphi 0, %s74
    %s89 = sphi 0, %s75
    %s93 = sphi 0, %s93
    %s95 = sphi 0, %s93
    %s96 = sphi 0, %s95
    %s110 = sphi 0, %s96
    %s114 = sphi 0, %s114
    %s116 = sphi 0, %s114
    %s117 = sphi 0, %s116
    %s131 = sphi 0, %s117
    %s135 = sphi 0, %s135
    %s137 = sphi 0, %s135
    %s138 = sphi 0, %s137
    %s152 = sphi 0, %s138
    %s158 = sphi 0, %s160
    %s161 = sphi 0, %s158
    %s162 = sphi 0, %s161
    %s178 = sphi 0, %s162
  $region4: #{_fuse_block_ca_v3_impl.1} parent=0 // loop_header_branch
    %15 = sbr.rel (%p13) target = $region8
  $region5: #{_fuse_block_ca_v3_impl.1} parent=0 // loop_body
    %s17 = ssub.s32 %s12, 1
    %s18 = ssub.s32 %s12, 2
    %s19 = sadd.s32 %s12, 1
    %s20 = ssub.s32 %s12, %s19
    %p21 = scmp.eq.s32.totalorder %s20, 0
    %s23 = sadd.s32 %s22, 1
    %s24 = scalar_select %p21, %s22, %s23
    %p27 = pneg %p21
    %p28 = scmp.eq.s32.totalorder %s12, 1
    %p29 = por %p27, %p28
    %p30 = scmp.ne.s32.totalorder %s22, %s25
    %p31 = scmp.eq.s32.totalorder %s12, 0
    %p32 = por %p30, %p31
    %p33 = scmp.ne.s32.totalorder %s22, %s25
    %p34 = scmp.eq.s32.totalorder %s17, 1
    %p35 = por %p33, %p34
    %p36 = scmp.ne.s32.totalorder %s25, %s26
    %p37 = scmp.eq.s32.totalorder %s17, 0
    %p38 = por %p36, %p37
    %p39 = scmp.ne.s32.totalorder %s25, %s26
    %p40 = scmp.eq.s32.totalorder %s18, 1
    %p41 = por %p39, %p40
    %p43 = scmp.ne.s32.totalorder %s26, %s42
    %p44 = scmp.eq.s32.totalorder %s18, 0
    %p45 = por %p43, %p44
    %s46 = ssub.s32 %s12, %s19
    %p47 = scmp.eq.s32.totalorder %s46, 0
    %s49 = sadd.s32 %s48, 1
    %s50 = scalar_select %p47, %s48, %s49
    %p53 = pneg %p47
    %p54 = scmp.eq.s32.totalorder %s12, 1
    %p55 = por %p53, %p54
    %p56 = scmp.ne.s32.totalorder %s48, %s51
    %p57 = scmp.eq.s32.totalorder %s12, 0
    %p58 = por %p56, %p57
    %p59 = scmp.ne.s32.totalorder %s48, %s51
    %p60 = scmp.eq.s32.totalorder %s17, 1
    %p61 = por %p59, %p60
    %p62 = scmp.ne.s32.totalorder %s51, %s52
    %p63 = scmp.eq.s32.totalorder %s17, 0
    %p64 = por %p62, %p63
    %p65 = scmp.ne.s32.totalorder %s51, %s52
    %p66 = scmp.eq.s32.totalorder %s18, 1
    %p67 = por %p65, %p66
    %p69 = scmp.ne.s32.totalorder %s52, %s68
    %p70 = scmp.eq.s32.totalorder %s18, 0
    %p71 = por %p69, %p70
    %s73 = sadd.s32 %s72, 1
    %p76 = scmp.eq.s32.totalorder %s12, 1
    %p77 = scmp.ne.s32.totalorder %s72, %s74
    %p78 = scmp.eq.s32.totalorder %s12, 0
    %p79 = por %p77, %p78
    %p80 = scmp.ne.s32.totalorder %s72, %s74
    %p81 = scmp.eq.s32.totalorder %s17, 1
    %p82 = por %p80, %p81
    %p83 = scmp.ne.s32.totalorder %s74, %s75
    %p84 = scmp.eq.s32.totalorder %s17, 0
    %p85 = por %p83, %p84
    %p86 = scmp.ne.s32.totalorder %s74, %s75
    %p87 = scmp.eq.s32.totalorder %s18, 1
    %p88 = por %p86, %p87
    %p90 = scmp.ne.s32.totalorder %s75, %s89
    %p91 = scmp.eq.s32.totalorder %s18, 0
    %p92 = por %p90, %p91
    %s94 = sadd.s32 %s93, 1
    %p97 = scmp.eq.s32.totalorder %s12, 1
    %p98 = scmp.ne.s32.totalorder %s93, %s95
    %p99 = scmp.eq.s32.totalorder %s12, 0
    %p100 = por %p98, %p99
    %p101 = scmp.ne.s32.totalorder %s93, %s95
    %p102 = scmp.eq.s32.totalorder %s17, 1
    %p103 = por %p101, %p102
    %p104 = scmp.ne.s32.totalorder %s95, %s96
    %p105 = scmp.eq.s32.totalorder %s17, 0
    %p106 = por %p104, %p105
    %p107 = scmp.ne.s32.totalorder %s95, %s96
    %p108 = scmp.eq.s32.totalorder %s18, 1
    %p109 = por %p107, %p108
    %p111 = scmp.ne.s32.totalorder %s96, %s110
    %p112 = scmp.eq.s32.totalorder %s18, 0
    %p113 = por %p111, %p112
    %s115 = sadd.s32 %s114, 1
    %p118 = scmp.eq.s32.totalorder %s12, 1
    %p119 = scmp.ne.s32.totalorder %s114, %s116
    %p120 = scmp.eq.s32.totalorder %s12, 0
    %p121 = por %p119, %p120
    %p122 = scmp.ne.s32.totalorder %s114, %s116
    %p123 = scmp.eq.s32.totalorder %s17, 1
    %p124 = por %p122, %p123
    %p125 = scmp.ne.s32.totalorder %s116, %s117
    %p126 = scmp.eq.s32.totalorder %s17, 0
    %p127 = por %p125, %p126
    %p128 = scmp.ne.s32.totalorder %s116, %s117
    %p129 = scmp.eq.s32.totalorder %s18, 1
    %p130 = por %p128, %p129
    %p132 = scmp.ne.s32.totalorder %s117, %s131
    %p133 = scmp.eq.s32.totalorder %s18, 0
    %p134 = por %p132, %p133
    %s136 = sadd.s32 %s135, 1
    %p139 = scmp.eq.s32.totalorder %s12, 1
    %p140 = scmp.ne.s32.totalorder %s135, %s137
    %p141 = scmp.eq.s32.totalorder %s12, 0
    %p142 = por %p140, %p141
    %p143 = scmp.ne.s32.totalorder %s135, %s137
    %p144 = scmp.eq.s32.totalorder %s17, 1
    %p145 = por %p143, %p144
    %p146 = scmp.ne.s32.totalorder %s137, %s138
    %p147 = scmp.eq.s32.totalorder %s17, 0
    %p148 = por %p146, %p147
    %p149 = scmp.ne.s32.totalorder %s137, %s138
    %p150 = scmp.eq.s32.totalorder %s18, 1
    %p151 = por %p149, %p150
    %p153 = scmp.ne.s32.totalorder %s138, %s152
    %p154 = scmp.eq.s32.totalorder %s18, 0
    %p155 = por %p153, %p154
    %s156 = ssub.s32 %s12, %s19
    %p157 = scmp.eq.s32.totalorder %s156, 0
    %s159 = sadd.s32 %s158, 1
    %s160 = scalar_select %p157, %s158, %s159
    %p163 = pneg %p157
    %p164 = scmp.eq.s32.totalorder %s12, 1
    %p165 = por %p163, %p164
    %p166 = scmp.ne.s32.totalorder %s158, %s161
    %p167 = scmp.eq.s32.totalorder %s12, 0
    %p168 = por %p166, %p167
    %p169 = scmp.ne.s32.totalorder %s158, %s161
    %p170 = scmp.eq.s32.totalorder %s17, 1
    %p171 = por %p169, %p170
    %p172 = scmp.ne.s32.totalorder %s161, %s162
    %p173 = scmp.eq.s32.totalorder %s17, 0
    %p174 = por %p172, %p173
    %p175 = scmp.ne.s32.totalorder %s161, %s162
    %p176 = scmp.eq.s32.totalorder %s18, 1
    %p177 = por %p175, %p176
    %p179 = scmp.ne.s32.totalorder %s162, %s178
    %p180 = scmp.eq.s32.totalorder %s18, 0
    %p181 = por %p179, %p180
    %p182 = scmp.le.s32.totalorder 1, %s12
    %p183 = scmp.lt.s32.totalorder %s12, 3
    %p184 = pnand %p182, %p183
    %p185 = pneg %p184
    // Predicated region
    $region9: #{_fuse_block_ca_v3_impl.1} parent=5 // pred_check
      _
    $region10: #{_fuse_block_ca_v3_impl.1} parent=5 // pred_check_branch
      %187 = sbr.rel (%p184) target = $region12
    $region11: #{_fuse_block_ca_v3_impl.1} parent=5 // pred_region
      %s188 = ssub.s32 %s12, 1
      // Predicated region
      $region13: #{_fuse_block_ca_v3_impl.1} parent=11 // pred_check
        %p189 = pneg %p85
      $region14: #{_fuse_block_ca_v3_impl.1} parent=11 // pred_check_branch
        %191 = sbr.rel (%p189) target = $region16
      $region15: #{_fuse_block_ca_v3_impl.1} parent=11 // pred_region
        _
      $region16: #{_fuse_block_ca_v3_impl.1} parent=11 // pred_fallthru
        _
      // Predicated region
      $region17: #{_fuse_block_ca_v3_impl.1} parent=11 // pred_check
        %p192 = pneg %p106
      $region18: #{_fuse_block_ca_v3_impl.1} parent=11 // pred_check_branch
        %194 = sbr.rel (%p192) target = $region20
      $region19: #{_fuse_block_ca_v3_impl.1} parent=11 // pred_region
        _
      $region20: #{_fuse_block_ca_v3_impl.1} parent=11 // pred_fallthru
        _
      // Predicated region
      $region21: #{_fuse_block_ca_v3_impl.1} parent=11 // pred_check
        %p195 = pneg %p127
      $region22: #{_fuse_block_ca_v3_impl.1} parent=11 // pred_check_branch
        %197 = sbr.rel (%p195) target = $region24
      $region23: #{_fuse_block_ca_v3_impl.1} parent=11 // pred_region
        _
      $region24: #{_fuse_block_ca_v3_impl.1} parent=11 // pred_fallthru
        _
      // Predicated region
      $region25: #{_fuse_block_ca_v3_impl.1} parent=11 // pred_check
        %p198 = pneg %p148
      $region26: #{_fuse_block_ca_v3_impl.1} parent=11 // pred_check_branch
        %200 = sbr.rel (%p198) target = $region28
      $region27: #{_fuse_block_ca_v3_impl.1} parent=11 // pred_region
        _
      $region28: #{_fuse_block_ca_v3_impl.1} parent=11 // pred_fallthru
        _
    $region12: #{_fuse_block_ca_v3_impl.1} parent=5 // pred_fallthru
      _
    %p201 = scmp.lt.s32.totalorder %s12, 2
    // Predicated region
    $region29: #{_fuse_block_ca_v3_impl.1} parent=5 // pred_check
      %p202 = pneg %p201
    $region30: #{_fuse_block_ca_v3_impl.1} parent=5 // pred_check_branch
      %204 = sbr.rel (%p202) target = $region32
    $region31: #{_fuse_block_ca_v3_impl.1} parent=5 // pred_region
      // Predicated region
      $region33: #{_fuse_block_ca_v3_impl.1} parent=31 // pred_check
        %p205 = pneg %p32
      $region34: #{_fuse_block_ca_v3_impl.1} parent=31 // pred_check_branch
        %207 = sbr.rel (%p205) target = $region36
      $region35: #{_fuse_block_ca_v3_impl.1} parent=31 // pred_region
        %p208 = scmp.lt.s32.totalorder %s12, 1
        %s209 = scalar_select %p208, %s12, 1
        %s210 = smul.addr %s209, 8
        %s211 = smul.addr %s210, 8
        %s212 = scalar_lea.vmem %s0, %s211
      $region36: #{_fuse_block_ca_v3_impl.1} parent=31 // pred_fallthru
        _
      // Predicated region
      $region37: #{_fuse_block_ca_v3_impl.1} parent=31 // pred_check
        %p213 = pneg %p58
      $region38: #{_fuse_block_ca_v3_impl.1} parent=31 // pred_check_branch
        %215 = sbr.rel (%p213) target = $region40
      $region39: #{_fuse_block_ca_v3_impl.1} parent=31 // pred_region
        %p216 = scmp.lt.s32.totalorder %s12, 1
        %s217 = scalar_select %p216, %s12, 1
        %s218 = smul.addr %s217, 8
        %s219 = smul.addr %s218, 8
        %s220 = scalar_lea.vmem %s1, %s219
      $region40: #{_fuse_block_ca_v3_impl.1} parent=31 // pred_fallthru
        _
    $region32: #{_fuse_block_ca_v3_impl.1} parent=5 // pred_fallthru
      _
    %p221 = scmp.le.s32.totalorder 1, %s12
    %p222 = scmp.lt.s32.totalorder %s12, 3
    %p223 = pnand %p221, %p222
    %p224 = pneg %p223
    // Predicated region
    $region41: #{_fuse_block_ca_v3_impl.1} parent=5 // pred_check
      _
    $region42: #{_fuse_block_ca_v3_impl.1} parent=5 // pred_check_branch
      %226 = sbr.rel (%p223) target = $region44
    $region43: #{_fuse_block_ca_v3_impl.1} parent=5 // pred_region
      %s227 = ssub.s32 %s12, 1
      %p228 = scmp.lt.s32.totalorder %s17, 1
      %s229 = scalar_select %p228, %s17, 1
      %s230 = smul.addr %s229, 8
      %s231 = smul.addr %s230, 8
      %s232 = scalar_lea.vmem %s0, %s231
      %p233 = pneg %p38
      %p234 = pneg %p35
      %p235 = scmp.lt.s32.totalorder %s17, 1
      %s236 = scalar_select %p235, %s17, 1
      %s237 = smul.addr %s236, 8
      %s238 = smul.addr %s237, 8
      %s239 = scalar_lea.vmem %s1, %s238
      %p240 = pneg %p64
      %p241 = pneg %p61
      %p242 = pneg %p85
      %p243 = pneg %p82
      %p244 = pneg %p106
      %p245 = pneg %p103
      %p246 = pneg %p127
      %p247 = pneg %p124
      %p248 = pneg %p148
      %p249 = pneg %p145
      %p250 = pneg %p174
      %p251 = pneg %p171
      %p252 = scmp.lt.s32.totalorder %s17, 1
      %s253 = scalar_select %p252, %s17, 1
      %s254 = smul.addr %s253, 8
      %s255 = smul.addr %s254, 8
      %s256 = scalar_lea.vmem %s6, %s255
      %p257 = scmp.lt.s32.totalorder %s17, 1
      %s258 = scalar_select %p257, %s17, 1
      %s259 = smul.addr %s258, 8
      %s260 = smul.addr %s259, 8
      %s261 = scalar_lea.vmem %s0, %s260
      %p262 = scmp.lt.s32.totalorder %s17, 1
      %s263 = scalar_select %p262, %s17, 1
      %s264 = smul.addr %s263, 8
      %s265 = smul.addr %s264, 8
      %s266 = scalar_lea.vmem %s1, %s265
      %p267 = scmp.lt.s32.totalorder %s17, 1
      %s268 = scalar_select %p267, %s17, 1
      %s269 = smul.addr %s268, 8
      %s270 = smul.addr %s269, 8
      %s271 = scalar_lea.vmem %s6, %s270
      %v274 = vld [vmem:[%s261] sm:$0xff]
      %v275 = vld [vmem:[%s261 + $0x8] sm:$0xff]
      %v276 = vld [vmem:[%s261 + $0x10] sm:$0xff]
      %v277 = vld [vmem:[%s261 + $0x18] sm:$0xff]
      %v278 = vld [vmem:[%s261 + $0x20] sm:$0xff]
      %v279 = vld [vmem:[%s261 + $0x28] sm:$0xff]
      %v280 = vld [vmem:[%s261 + $0x30] sm:$0xff]
      %v281 = vld [vmem:[%s261 + $0x38] sm:$0xff]
      %v282 = vld [vmem:[%s266] sm:$0xff]
      %v283 = vld [vmem:[%s266 + $0x8] sm:$0xff]
      %v284 = vld [vmem:[%s266 + $0x10] sm:$0xff]
      %v285 = vld [vmem:[%s266 + $0x18] sm:$0xff]
      %v286 = vld [vmem:[%s266 + $0x20] sm:$0xff]
      %v287 = vld [vmem:[%s266 + $0x28] sm:$0xff]
      %v288 = vld [vmem:[%s266 + $0x30] sm:$0xff]
      %v289 = vld [vmem:[%s266 + $0x38] sm:$0xff]
      %v290 = vpack.c.bf16 %v276, %v274
      %v291 = vpack.c.bf16 %v277, %v275
      %v292 = vpack.c.bf16 %v280, %v278
      %v293 = vpack.c.bf16 %v281, %v279
      %v294 = vpack.c.bf16 %v284, %v282
      %v295 = vpack.c.bf16 %v285, %v283
      %v296 = vpack.c.bf16 %v288, %v286
      %v297 = vpack.c.bf16 %v289, %v287
      %v298 = vld [vmem:[%s2] sm:$0xf]
      %v299 = vld [vmem:[%s2 + $0x4] sm:$0xf]
      %v300 = vld [vmem:[%s2 + $0x8] sm:$0xf]
      %v301 = vld [vmem:[%s2 + $0xc] sm:$0xf]
      %v302 = vld [vmem:[%s2 + $0x10] sm:$0xf]
      %v303 = vld [vmem:[%s2 + $0x14] sm:$0xf]
      %v304 = vld [vmem:[%s2 + $0x18] sm:$0xf]
      %v305 = vld [vmem:[%s2 + $0x1c] sm:$0xf]
      %v306 = vld [vmem:[%s2 + $0x20] sm:$0xf]
      %v307 = vld [vmem:[%s2 + $0x24] sm:$0xf]
      %v308 = vld [vmem:[%s2 + $0x28] sm:$0xf]
      %v309 = vld [vmem:[%s2 + $0x2c] sm:$0xf]
      %v310 = vld [vmem:[%s2 + $0x30] sm:$0xf]
      %v311 = vld [vmem:[%s2 + $0x34] sm:$0xf]
      %v312 = vld [vmem:[%s2 + $0x38] sm:$0xf]
      %v313 = vld [vmem:[%s2 + $0x3c] sm:$0xf]
      %v314 = vld [vmem:[%s2 + $0x40] sm:$0xf]
      %v315 = vld [vmem:[%s2 + $0x44] sm:$0xf]
      %v316 = vld [vmem:[%s2 + $0x48] sm:$0xf]
      %v317 = vld [vmem:[%s2 + $0x4c] sm:$0xf]
      %v318 = vld [vmem:[%s2 + $0x50] sm:$0xf]
      %v319 = vld [vmem:[%s2 + $0x54] sm:$0xf]
      %v320 = vld [vmem:[%s2 + $0x58] sm:$0xf]
      %v321 = vld [vmem:[%s2 + $0x5c] sm:$0xf]
      %v322 = vld [vmem:[%s2 + $0x60] sm:$0xf]
      %v323 = vld [vmem:[%s2 + $0x64] sm:$0xf]
      %v324 = vld [vmem:[%s2 + $0x68] sm:$0xf]
      %v325 = vld [vmem:[%s2 + $0x6c] sm:$0xf]
      %v326 = vld [vmem:[%s2 + $0x70] sm:$0xf]
      %v327 = vld [vmem:[%s2 + $0x74] sm:$0xf]
      %v328 = vld [vmem:[%s2 + $0x78] sm:$0xf]
      %v329 = vld [vmem:[%s2 + $0x7c] sm:$0xf]
      %v362 = vunpack.c.l.b16 %v298
      %v363 = vunpack.c.l.b16 %v299
      %v364 = vunpack.c.l.b16 %v300
      %v365 = vunpack.c.l.b16 %v301
      %v366 = vunpack.c.l.b16 %v302
      %v367 = vunpack.c.l.b16 %v303
      %v368 = vunpack.c.l.b16 %v304
      %v369 = vunpack.c.l.b16 %v305
      %v370 = vunpack.c.l.b16 %v306
      %v371 = vunpack.c.l.b16 %v307
      %v372 = vunpack.c.l.b16 %v308
      %v373 = vunpack.c.l.b16 %v309
      %v374 = vunpack.c.l.b16 %v310
      %v375 = vunpack.c.l.b16 %v311
      %v376 = vunpack.c.l.b16 %v312
      %v377 = vunpack.c.l.b16 %v313
      %v378 = vunpack.c.l.b16 %v314
      %v379 = vunpack.c.l.b16 %v315
      %v380 = vunpack.c.l.b16 %v316
      %v381 = vunpack.c.l.b16 %v317
      %v382 = vunpack.c.l.b16 %v318
      %v383 = vunpack.c.l.b16 %v319
      %v384 = vunpack.c.l.b16 %v320
      %v385 = vunpack.c.l.b16 %v321
      %v386 = vunpack.c.l.b16 %v322
      %v387 = vunpack.c.l.b16 %v323
      %v388 = vunpack.c.l.b16 %v324
      %v389 = vunpack.c.l.b16 %v325
      %v390 = vunpack.c.l.b16 %v326
      %v391 = vunpack.c.l.b16 %v327
      %v392 = vunpack.c.l.b16 %v328
      %v393 = vunpack.c.l.b16 %v329
      %v394 = vpack.c.b16 %v363, %v362
      %v395 = vpack.c.b16 %v365, %v364
      %v396 = vpack.c.b16 %v367, %v366
      %v397 = vpack.c.b16 %v369, %v368
      %v398 = vpack.c.b16 %v371, %v370
      %v399 = vpack.c.b16 %v373, %v372
      %v400 = vpack.c.b16 %v375, %v374
      %v401 = vpack.c.b16 %v377, %v376
      %v402 = vpack.c.b16 %v379, %v378
      %v403 = vpack.c.b16 %v381, %v380
      %v404 = vpack.c.b16 %v383, %v382
      %v405 = vpack.c.b16 %v385, %v384
      %v406 = vpack.c.b16 %v387, %v386
      %v407 = vpack.c.b16 %v389, %v388
      %v408 = vpack.c.b16 %v391, %v390
      %v409 = vpack.c.b16 %v393, %v392
      %426 = vmatprep.subr.bf16.mxu0 0
      %427 = vmatpush1.bf16.msra.mxu0 %v401
      %428 = vmatprep.subr.bf16.mxu0 0
      %429 = vmatpush1.bf16.msra.mxu0 %v400
      %430 = vmatprep.subr.bf16.mxu0 0
      %431 = vmatpush1.bf16.msra.mxu0 %v399
      %432 = vmatprep.subr.bf16.mxu0 0
      %433 = vmatpush1.bf16.msra.mxu0 %v398
      %434 = vmatprep.subr.bf16.mxu0 0
      %435 = vmatpush1.bf16.msra.mxu0 %v397
      %436 = vmatprep.subr.bf16.mxu0 0
      %437 = vmatpush1.bf16.msra.mxu0 %v396
      %438 = vmatprep.subr.bf16.mxu0 0
      %439 = vmatpush1.bf16.msra.mxu0 %v395
      %440 = vmatprep.subr.bf16.mxu0 0
      %441 = vmatpush1.bf16.msra.mxu0 %v394
      %442 = vmatprep.subr.bf16.mxu0 0
      %443 = vmatpush2.bf16.msra.mxu0 %v409
      %444 = vmatprep.subr.bf16.mxu0 0
      %445 = vmatpush2.bf16.msra.mxu0 %v408
      %446 = vmatprep.subr.bf16.mxu0 0
      %447 = vmatpush2.bf16.msra.mxu0 %v407
      %448 = vmatprep.subr.bf16.mxu0 0
      %449 = vmatpush2.bf16.msra.mxu0 %v406
      %450 = vmatprep.subr.bf16.mxu0 0
      %451 = vmatpush2.bf16.msra.mxu0 %v405
      %452 = vmatprep.subr.bf16.mxu0 0
      %453 = vmatpush2.bf16.msra.mxu0 %v404
      %454 = vmatprep.subr.bf16.mxu0 0
      %455 = vmatpush2.bf16.msra.mxu0 %v403
      %456 = vmatprep.subr.bf16.mxu0 0
      %457 = vmatpush2.bf16.msra.mxu0 %v402
      %458 = vmatprep.mubr.bf16.mxu0 %v291
      %459 = vmatmul.mubr.bf16.gmra.mxu0 %v290
      %v460 = vpop.f32.mrf.mxu0
      %v461 = vadd.f32 0.0, %v460
      %v462 = vpop.f32.mrf.mxu0
      %v463 = vpop.f32.mrf.mxu0
      %v464 = vadd.f32 0.0, %v463
      %v465 = vpop.f32.mrf.mxu0
      %466 = vmatprep.mubr.bf16.mxu0 %v293
      %467 = vmatmul.mubr.bf16.gmra.mxu0 %v292
      %v468 = vpop.f32.mrf.mxu0
      %v469 = vadd.f32 0.0, %v468
      %v470 = vpop.f32.mrf.mxu0
      %v471 = vpop.f32.mrf.mxu0
      %v472 = vadd.f32 0.0, %v471
      %v473 = vpop.f32.mrf.mxu0
      %474 = vmatprep.mubr.bf16.mxu0 %v295
      %475 = vmatmul.mubr.bf16.gmra.mxu0 %v294
      %v476 = vpop.f32.mrf.mxu0
      %v477 = vadd.f32 0.0, %v476
      %v478 = vpop.f32.mrf.mxu0
      %v479 = vpop.f32.mrf.mxu0
      %v480 = vadd.f32 0.0, %v479
      %v481 = vpop.f32.mrf.mxu0
      %482 = vmatprep.mubr.bf16.mxu0 %v297
      %483 = vmatmul.mubr.bf16.gmra.mxu0 %v296
      %v484 = vpop.f32.mrf.mxu0
      %v485 = vadd.f32 0.0, %v484
      %v486 = vpop.f32.mrf.mxu0
      %v487 = vpop.f32.mrf.mxu0
      %v488 = vadd.f32 0.0, %v487
      %v489 = vpop.f32.mrf.mxu0
      %490 = vdwg.mxu0
      %v491 = vlaneseq
      %v492 = vshrl.u32 %v491, 7
      %v493 = vadd.s32 %v492, 8
      %v494 = vadd.s32 %v492, 16
      %v495 = vadd.s32 %v492, 24
      %v496 = vadd.s32 %v492, 32
      %v497 = vadd.s32 %v492, 40
      %v498 = vadd.s32 %v492, 48
      %v499 = vadd.s32 %v492, 56
      %v500 = vadd.s32 %v492, 64
      %v501 = vadd.s32 %v492, 72
      %v502 = vadd.s32 %v492, 80
      %v503 = vadd.s32 %v492, 88
      %v504 = vadd.s32 %v492, 96
      %v505 = vadd.s32 %v492, 104
      %v506 = vadd.s32 %v492, 112
      %v507 = vadd.s32 %v492, 120
      %v508 = vlaneseq
      %v509 = vand.u32 %v508, 127
      %vm510 = vcmp.lt.s32.totalorder %v492, 64
      %vm511 = vcmp.lt.s32.totalorder %v493, 64
      %vm512 = vcmp.lt.s32.totalorder %v494, 64
      %vm513 = vcmp.lt.s32.totalorder %v495, 64
      %vm514 = vcmp.lt.s32.totalorder %v496, 64
      %vm515 = vcmp.lt.s32.totalorder %v497, 64
      %vm516 = vcmp.lt.s32.totalorder %v498, 64
      %vm517 = vcmp.lt.s32.totalorder %v499, 64
      %vm518 = vcmp.lt.s32.totalorder %v500, 64
      %vm519 = vcmp.lt.s32.totalorder %v501, 64
      %vm520 = vcmp.lt.s32.totalorder %v502, 64
      %vm521 = vcmp.lt.s32.totalorder %v503, 64
      %vm522 = vcmp.lt.s32.totalorder %v504, 64
      %vm523 = vcmp.lt.s32.totalorder %v505, 64
      %vm524 = vcmp.lt.s32.totalorder %v506, 64
      %vm525 = vcmp.lt.s32.totalorder %v507, 64
      %vm526 = vcmp.lt.s32.totalorder %v509, 16
      %vm527 = vmxor %vm510, %vm526
      %vm528 = vmxor %vm511, %vm526
      %vm529 = vmxor %vm512, %vm526
      %vm530 = vmxor %vm513, %vm526
      %vm531 = vmxor %vm514, %vm526
      %vm532 = vmxor %vm515, %vm526
      %vm533 = vmxor %vm516, %vm526
      %vm534 = vmxor %vm517, %vm526
      %vm535 = vmxor %vm518, %vm526
      %vm536 = vmxor %vm519, %vm526
      %vm537 = vmxor %vm520, %vm526
      %vm538 = vmxor %vm521, %vm526
      %vm539 = vmxor %vm522, %vm526
      %vm540 = vmxor %vm523, %vm526
      %vm541 = vmxor %vm524, %vm526
      %vm542 = vmxor %vm525, %vm526
      %vm543 = vmxor %vm527, 1
      %vm544 = vmxor %vm528, 1
      %vm545 = vmxor %vm529, 1
      %vm546 = vmxor %vm530, 1
      %vm547 = vmxor %vm531, 1
      %vm548 = vmxor %vm532, 1
      %vm549 = vmxor %vm533, 1
      %vm550 = vmxor %vm534, 1
      %vm551 = vmxor %vm535, 1
      %vm552 = vmxor %vm536, 1
      %vm553 = vmxor %vm537, 1
      %vm554 = vmxor %vm538, 1
      %vm555 = vmxor %vm539, 1
      %vm556 = vmxor %vm540, 1
      %vm557 = vmxor %vm541, 1
      %vm558 = vmxor %vm542, 1
      %v559 = vld [vmem:[%s4] sm:$0x3]
      %v560 = vld [vmem:[%s5] sm:$0xf]
      %v561 = vld [vmem:[%s5 + $0x4] sm:$0xf]
      %v562 = vld [vmem:[%s5 + $0x8] sm:$0xf]
      %v563 = vld [vmem:[%s5 + $0xc] sm:$0xf]
      %v564 = vld [vmem:[%s5 + $0x10] sm:$0xf]
      %v565 = vld [vmem:[%s5 + $0x14] sm:$0xf]
      %v566 = vld [vmem:[%s5 + $0x18] sm:$0xf]
      %v567 = vld [vmem:[%s5 + $0x1c] sm:$0xf]
      %v568 = vld [vmem:[%s5 + $0x20] sm:$0xf]
      %v569 = vld [vmem:[%s5 + $0x24] sm:$0xf]
      %v570 = vld [vmem:[%s5 + $0x28] sm:$0xf]
      %v571 = vld [vmem:[%s5 + $0x2c] sm:$0xf]
      %v572 = vld [vmem:[%s5 + $0x30] sm:$0xf]
      %v573 = vld [vmem:[%s5 + $0x34] sm:$0xf]
      %v574 = vld [vmem:[%s5 + $0x38] sm:$0xf]
      %v575 = vld [vmem:[%s5 + $0x3c] sm:$0xf]
      %v576 = vld [vmem:[%s3] sm:$0xff]
      %v577 = vld [vmem:[%s3 + $0x8] sm:$0xff]
      %v578 = vld [vmem:[%s3 + $0x10] sm:$0xff]
      %v579 = vld [vmem:[%s3 + $0x18] sm:$0xff]
      %v580 = vpack.c.bf16 %v464, %v461
      %v581 = vpack.c.bf16 %v472, %v469
      %v582 = vpack.c.bf16 %v480, %v477
      %v583 = vpack.c.bf16 %v488, %v485
      %vm584 = vcmask 531456
      %v586 = vsel %vm584, %v559, 0
      %vm588 = vcmask 1040384
      %v589 = vsel 0, 4294967295, 65535
      %v590 = vsel %vm588, %v589, 0
      %v592 = vand.u32 1065369472, %v590
      %594 = vmatprep.subr.bf16.mxu0 0
      %595 = vmatpush1.bf16.msra.mxu0 0
      %596 = vmatprep.subr.bf16.mxu0 0
      %597 = vmatpush1.bf16.msra.mxu0 0
      %598 = vmatprep.subr.bf16.mxu0 0
      %599 = vmatpush1.bf16.msra.mxu0 0
      %600 = vmatprep.subr.bf16.mxu0 0
      %601 = vmatpush1.bf16.msra.mxu0 %v592
      %602 = vmatprep.subr.bf16.mxu0 0
      %603 = vmatpush1.bf16.msra.mxu0 %v583
      %604 = vmatprep.subr.bf16.mxu0 0
      %605 = vmatpush1.bf16.msra.mxu0 %v582
      %606 = vmatprep.subr.bf16.mxu0 0
      %607 = vmatpush1.bf16.msra.mxu0 %v581
      %608 = vmatprep.subr.bf16.mxu0 0
      %609 = vmatpush1.bf16.msra.mxu0 %v580
      %610 = vmatprep.subr.bf16.mxu0 0
      %611 = vmatpush2.bf16.msra.mxu0 0
      %612 = vmatprep.subr.bf16.mxu0 0
      %613 = vmatpush2.bf16.msra.mxu0 0
      %614 = vmatprep.subr.bf16.mxu0 0
      %615 = vmatpush2.bf16.msra.mxu0 0
      %616 = vmatprep.subr.bf16.mxu0 0
      %617 = vmatpush2.bf16.msra.mxu0 0
      %618 = vmatprep.subr.bf16.mxu0 0
      %619 = vmatpush2.bf16.msra.mxu0 0
      %620 = vmatprep.subr.bf16.mxu0 0
      %621 = vmatpush2.bf16.msra.mxu0 0
      %622 = vmatprep.subr.bf16.mxu0 0
      %623 = vmatpush2.bf16.msra.mxu0 0
      %624 = vmatprep.subr.bf16.mxu0 0
      %625 = vmatpush2.bf16.msra.mxu0 0
      %626 = vmatprep.mubr.bf16.mxu0 0
      %627 = vmatmul.mubr.bf16.gmra.mxu0 %v586
      %v628 = vpop.f32.mrf.mxu0
      %v629 = vadd.f32 0.0, %v628
      %v630 = vpop.f32.mrf.mxu0
      %v631 = vpop.f32.mrf.mxu0
      %v632 = vpop.f32.mrf.mxu0
      %633 = vdwg.mxu0
      %v634 = vxor.u32 %v629, 2147483648
      %v635 = vmul.f32 %v634, 1.442695
      %v636 = vpow.pop %v635
      %v637 = vadd.f32 %v636, 1.0
      %v638 = vrcp.pop %v637
      %v639 = vmul.f32 1.0, %v638
      %v640 = vmul.f32 %v629, %v639
      %v641 = vpack.c.bf16 %v640, %v640
      %v658 = vunpack.c.l.b16 %v560
      %v659 = vunpack.c.l.b16 %v561
      %v660 = vunpack.c.l.b16 %v562
      %v661 = vunpack.c.l.b16 %v563
      %v662 = vunpack.c.l.b16 %v564
      %v663 = vunpack.c.l.b16 %v565
      %v664 = vunpack.c.l.b16 %v566
      %v665 = vunpack.c.l.b16 %v567
      %v666 = vunpack.c.l.b16 %v568
      %v667 = vunpack.c.l.b16 %v569
      %v668 = vunpack.c.l.b16 %v570
      %v669 = vunpack.c.l.b16 %v571
      %v670 = vunpack.c.l.b16 %v572
      %v671 = vunpack.c.l.b16 %v573
      %v672 = vunpack.c.l.b16 %v574
      %v673 = vunpack.c.l.b16 %v575
      %v674 = vpack.c.b16 %v659, %v658
      %v675 = vpack.c.b16 %v661, %v660
      %v676 = vpack.c.b16 %v663, %v662
      %v677 = vpack.c.b16 %v665, %v664
      %v678 = vpack.c.b16 %v667, %v666
      %v679 = vpack.c.b16 %v669, %v668
      %v680 = vpack.c.b16 %v671, %v670
      %v681 = vpack.c.b16 %v673, %v672
      %vm682 = vcmask 31744
      %v684 = vsel %vm682, %v674, 0
      %v687 = vsel %vm682, %v675, 0
      %v690 = vsel %vm682, %v676, 0
      %v693 = vsel %vm682, %v677, 0
      %v696 = vsel %vm682, %v678, 0
      %v699 = vsel %vm682, %v679, 0
      %v702 = vsel %vm682, %v680, 0
      %v705 = vsel %vm682, %v681, 0
      %vm707 = vcmask 1041408
      %v709 = vsel %vm707, %v641, 0
      %711 = vmatprep.subr.bf16.mxu0 0
      %712 = vmatpush1.bf16.msra.mxu0 0
      %713 = vmatprep.subr.bf16.mxu0 0
      %714 = vmatpush1.bf16.msra.mxu0 0
      %715 = vmatprep.subr.bf16.mxu0 0
      %716 = vmatpush1.bf16.msra.mxu0 0
      %717 = vmatprep.subr.bf16.mxu0 0
      %718 = vmatpush1.bf16.msra.mxu0 0
      %719 = vmatprep.subr.bf16.mxu0 0
      %720 = vmatpush1.bf16.msra.mxu0 0
      %721 = vmatprep.subr.bf16.mxu0 0
      %722 = vmatpush1.bf16.msra.mxu0 0
      %723 = vmatprep.subr.bf16.mxu0 0
      %724 = vmatpush1.bf16.msra.mxu0 0
      %725 = vmatprep.subr.bf16.mxu0 0
      %726 = vmatpush1.bf16.msra.mxu0 %v709
      %727 = vmatprep.subr.bf16.mxu0 0
      %728 = vmatpush2.bf16.msra.mxu0 0
      %729 = vmatprep.subr.bf16.mxu0 0
      %730 = vmatpush2.bf16.msra.mxu0 0
      %731 = vmatprep.subr.bf16.mxu0 0
      %732 = vmatpush2.bf16.msra.mxu0 0
      %733 = vmatprep.subr.bf16.mxu0 0
      %734 = vmatpush2.bf16.msra.mxu0 0
      %735 = vmatprep.subr.bf16.mxu0 0
      %736 = vmatpush2.bf16.msra.mxu0 0
      %737 = vmatprep.subr.bf16.mxu0 0
      %738 = vmatpush2.bf16.msra.mxu0 0
      %739 = vmatprep.subr.bf16.mxu0 0
      %740 = vmatpush2.bf16.msra.mxu0 0
      %741 = vmatprep.subr.bf16.mxu0 0
      %742 = vmatpush2.bf16.msra.mxu0 0
      %743 = vmatprep.mubr.bf16.mxu0 0
      %744 = vmatmul.mubr.bf16.gmra.mxu0 %v684
      %v745 = vpop.f32.mrf.mxu0
      %v746 = vadd.f32 0.0, %v745
      %v747 = vpop.f32.mrf.mxu0
      %v748 = vpop.f32.mrf.mxu0
      %v749 = vadd.f32 0.0, %v748
      %v750 = vpop.f32.mrf.mxu0
      %751 = vmatprep.mubr.bf16.mxu0 0
      %752 = vmatmul.mubr.bf16.gmra.mxu0 %v687
      %v753 = vpop.f32.mrf.mxu0
      %v754 = vadd.f32 0.0, %v753
      %v755 = vpop.f32.mrf.mxu0
      %v756 = vpop.f32.mrf.mxu0
      %v757 = vadd.f32 0.0, %v756
      %v758 = vpop.f32.mrf.mxu0
      %759 = vmatprep.mubr.bf16.mxu0 0
      %760 = vmatmul.mubr.bf16.gmra.mxu0 %v690
      %v761 = vpop.f32.mrf.mxu0
      %v762 = vadd.f32 0.0, %v761
      %v763 = vpop.f32.mrf.mxu0
      %v764 = vpop.f32.mrf.mxu0
      %v765 = vadd.f32 0.0, %v764
      %v766 = vpop.f32.mrf.mxu0
      %767 = vmatprep.mubr.bf16.mxu0 0
      %768 = vmatmul.mubr.bf16.gmra.mxu0 %v693
      %v769 = vpop.f32.mrf.mxu0
      %v770 = vadd.f32 0.0, %v769
      %v771 = vpop.f32.mrf.mxu0
      %v772 = vpop.f32.mrf.mxu0
      %v773 = vadd.f32 0.0, %v772
      %v774 = vpop.f32.mrf.mxu0
      %775 = vmatprep.mubr.bf16.mxu0 0
      %776 = vmatmul.mubr.bf16.gmra.mxu0 %v696
      %v777 = vpop.f32.mrf.mxu0
      %v778 = vadd.f32 0.0, %v777
      %v779 = vpop.f32.mrf.mxu0
      %v780 = vpop.f32.mrf.mxu0
      %v781 = vadd.f32 0.0, %v780
      %v782 = vpop.f32.mrf.mxu0
      %783 = vmatprep.mubr.bf16.mxu0 0
      %784 = vmatmul.mubr.bf16.gmra.mxu0 %v699
      %v785 = vpop.f32.mrf.mxu0
      %v786 = vadd.f32 0.0, %v785
      %v787 = vpop.f32.mrf.mxu0
      %v788 = vpop.f32.mrf.mxu0
      %v789 = vadd.f32 0.0, %v788
      %v790 = vpop.f32.mrf.mxu0
      %791 = vmatprep.mubr.bf16.mxu0 0
      %792 = vmatmul.mubr.bf16.gmra.mxu0 %v702
      %v793 = vpop.f32.mrf.mxu0
      %v794 = vadd.f32 0.0, %v793
      %v795 = vpop.f32.mrf.mxu0
      %v796 = vpop.f32.mrf.mxu0
      %v797 = vadd.f32 0.0, %v796
      %v798 = vpop.f32.mrf.mxu0
      %799 = vmatprep.mubr.bf16.mxu0 0
      %800 = vmatmul.mubr.bf16.gmra.mxu0 %v705
      %v801 = vpop.f32.mrf.mxu0
      %v802 = vadd.f32 0.0, %v801
      %v803 = vpop.f32.mrf.mxu0
      %v804 = vpop.f32.mrf.mxu0
      %v805 = vadd.f32 0.0, %v804
      %v806 = vpop.f32.mrf.mxu0
      %807 = vdwg.mxu0
      %v808 = vxor.u32 %v746, 2147483648
      %v809 = vxor.u32 %v749, 2147483648
      %v810 = vxor.u32 %v754, 2147483648
      %v811 = vxor.u32 %v757, 2147483648
      %v812 = vxor.u32 %v762, 2147483648
      %v813 = vxor.u32 %v765, 2147483648
      %v814 = vxor.u32 %v770, 2147483648
      %v815 = vxor.u32 %v773, 2147483648
      %v816 = vxor.u32 %v778, 2147483648
      %v817 = vxor.u32 %v781, 2147483648
      %v818 = vxor.u32 %v786, 2147483648
      %v819 = vxor.u32 %v789, 2147483648
      %v820 = vxor.u32 %v794, 2147483648
      %v821 = vxor.u32 %v797, 2147483648
      %v822 = vxor.u32 %v802, 2147483648
      %v823 = vxor.u32 %v805, 2147483648
      %v824 = vmul.f32 %v808, 1.442695
      %v825 = vpow.pop %v824
      %v826 = vmul.f32 %v809, 1.442695
      %v827 = vpow.pop %v826
      %v828 = vmul.f32 %v810, 1.442695
      %v829 = vpow.pop %v828
      %v830 = vmul.f32 %v811, 1.442695
      %v831 = vpow.pop %v830
      %v832 = vmul.f32 %v812, 1.442695
      %v833 = vpow.pop %v832
      %v834 = vmul.f32 %v813, 1.442695
      %v835 = vpow.pop %v834
      %v836 = vmul.f32 %v814, 1.442695
      %v837 = vpow.pop %v836
      %v838 = vmul.f32 %v815, 1.442695
      %v839 = vpow.pop %v838
      %v840 = vmul.f32 %v816, 1.442695
      %v841 = vpow.pop %v840
      %v842 = vmul.f32 %v817, 1.442695
      %v843 = vpow.pop %v842
      %v844 = vmul.f32 %v818, 1.442695
      %v845 = vpow.pop %v844
      %v846 = vmul.f32 %v819, 1.442695
      %v847 = vpow.pop %v846
      %v848 = vmul.f32 %v820, 1.442695
      %v849 = vpow.pop %v848
      %v850 = vmul.f32 %v821, 1.442695
      %v851 = vpow.pop %v850
      %v852 = vmul.f32 %v822, 1.442695
      %v853 = vpow.pop %v852
      %v854 = vmul.f32 %v823, 1.442695
      %v855 = vpow.pop %v854
      %v856 = vadd.f32 %v825, 1.0
      %v857 = vadd.f32 %v827, 1.0
      %v858 = vadd.f32 %v829, 1.0
      %v859 = vadd.f32 %v831, 1.0
      %v860 = vadd.f32 %v833, 1.0
      %v861 = vadd.f32 %v835, 1.0
      %v862 = vadd.f32 %v837, 1.0
      %v863 = vadd.f32 %v839, 1.0
      %v864 = vadd.f32 %v841, 1.0
      %v865 = vadd.f32 %v843, 1.0
      %v866 = vadd.f32 %v845, 1.0
      %v867 = vadd.f32 %v847, 1.0
      %v868 = vadd.f32 %v849, 1.0
      %v869 = vadd.f32 %v851, 1.0
      %v870 = vadd.f32 %v853, 1.0
      %v871 = vadd.f32 %v855, 1.0
      %v872 = vrcp.pop %v856
      %v873 = vmul.f32 1.0, %v872
      %v874 = vrcp.pop %v857
      %v875 = vmul.f32 1.0, %v874
      %v876 = vrcp.pop %v858
      %v877 = vmul.f32 1.0, %v876
      %v878 = vrcp.pop %v859
      %v879 = vmul.f32 1.0, %v878
      %v880 = vrcp.pop %v860
      %v881 = vmul.f32 1.0, %v880
      %v882 = vrcp.pop %v861
      %v883 = vmul.f32 1.0, %v882
      %v884 = vrcp.pop %v862
      %v885 = vmul.f32 1.0, %v884
      %v886 = vrcp.pop %v863
      %v887 = vmul.f32 1.0, %v886
      %v888 = vrcp.pop %v864
      %v889 = vmul.f32 1.0, %v888
      %v890 = vrcp.pop %v865
      %v891 = vmul.f32 1.0, %v890
      %v892 = vrcp.pop %v866
      %v893 = vmul.f32 1.0, %v892
      %v894 = vrcp.pop %v867
      %v895 = vmul.f32 1.0, %v894
      %v896 = vrcp.pop %v868
      %v897 = vmul.f32 1.0, %v896
      %v898 = vrcp.pop %v869
      %v899 = vmul.f32 1.0, %v898
      %v900 = vrcp.pop %v870
      %v901 = vmul.f32 1.0, %v900
      %v902 = vrcp.pop %v871
      %v903 = vmul.f32 1.0, %v902
      %v904 = vsel %vm543, %v873, 0.0
      %v905 = vsel %vm544, %v875, 0.0
      %v906 = vsel %vm545, %v877, 0.0
      %v907 = vsel %vm546, %v879, 0.0
      %v908 = vsel %vm547, %v881, 0.0
      %v909 = vsel %vm548, %v883, 0.0
      %v910 = vsel %vm549, %v885, 0.0
      %v911 = vsel %vm550, %v887, 0.0
      %v912 = vsel %vm551, %v889, 0.0
      %v913 = vsel %vm552, %v891, 0.0
      %v914 = vsel %vm553, %v893, 0.0
      %v915 = vsel %vm554, %v895, 0.0
      %v916 = vsel %vm555, %v897, 0.0
      %v917 = vsel %vm556, %v899, 0.0
      %v918 = vsel %vm557, %v901, 0.0
      %v919 = vsel %vm558, %v903, 0.0
      %v920 = vpack.c.bf16 %v905, %v904
      %v921 = vpack.c.bf16 %v907, %v906
      %v922 = vpack.c.bf16 %v909, %v908
      %v923 = vpack.c.bf16 %v911, %v910
      %v924 = vpack.c.bf16 %v913, %v912
      %v925 = vpack.c.bf16 %v915, %v914
      %v926 = vpack.c.bf16 %v917, %v916
      %v927 = vpack.c.bf16 %v919, %v918
      %v932 = vunpack.c.l.b16 %v576
      %v933 = vunpack.c.h.b16 %v576
      %v934 = vunpack.c.l.b16 %v577
      %v935 = vunpack.c.h.b16 %v577
      %v936 = vunpack.c.l.b16 %v578
      %v937 = vunpack.c.h.b16 %v578
      %v938 = vunpack.c.l.b16 %v579
      %v939 = vunpack.c.h.b16 %v579
      %v940 = vpack.c.b16 %v934, %v932
      %v941 = vpack.c.b16 %v935, %v933
      %v942 = vpack.c.b16 %v938, %v936
      %v943 = vpack.c.b16 %v939, %v937
      %vm948 = vcmask 261120
      %v950 = vsel %vm948, %v920, 0
      %v953 = vsel %vm948, %v921, 0
      %v956 = vsel %vm948, %v922, 0
      %v959 = vsel %vm948, %v923, 0
      %v962 = vsel %vm948, %v924, 0
      %v965 = vsel %vm948, %v925, 0
      %v968 = vsel %vm948, %v926, 0
      %v971 = vsel %vm948, %v927, 0
      %973 = vmatprep.subr.bf16.mxu0 0
      %974 = vmatpush1.bf16.msra.mxu0 0
      %975 = vmatprep.subr.bf16.mxu0 0
      %976 = vmatpush1.bf16.msra.mxu0 0
      %977 = vmatprep.subr.bf16.mxu0 0
      %978 = vmatpush1.bf16.msra.mxu0 0
      %979 = vmatprep.subr.bf16.mxu0 0
      %980 = vmatpush1.bf16.msra.mxu0 0
      %981 = vmatprep.subr.bf16.mxu0 0
      %982 = vmatpush1.bf16.msra.mxu0 0
      %983 = vmatprep.subr.bf16.mxu0 0
      %984 = vmatpush1.bf16.msra.mxu0 0
      %985 = vmatprep.subr.bf16.mxu0 %v943
      %986 = vmatpush1.bf16.msra.mxu0 %v942
      %987 = vmatprep.subr.bf16.mxu0 %v941
      %988 = vmatpush1.bf16.msra.mxu0 %v940
      %989 = vmatprep.subr.bf16.mxu0 0
      %990 = vmatpush2.bf16.msra.mxu0 0
      %991 = vmatprep.subr.bf16.mxu0 0
      %992 = vmatpush2.bf16.msra.mxu0 0
      %993 = vmatprep.subr.bf16.mxu0 0
      %994 = vmatpush2.bf16.msra.mxu0 0
      %995 = vmatprep.subr.bf16.mxu0 0
      %996 = vmatpush2.bf16.msra.mxu0 0
      %997 = vmatprep.subr.bf16.mxu0 0
      %998 = vmatpush2.bf16.msra.mxu0 0
      %999 = vmatprep.subr.bf16.mxu0 0
      %1000 = vmatpush2.bf16.msra.mxu0 0
      %1001 = vmatprep.subr.bf16.mxu0 0
      %1002 = vmatpush2.bf16.msra.mxu0 0
      %1003 = vmatprep.subr.bf16.mxu0 0
      %1004 = vmatpush2.bf16.msra.mxu0 0
      %1005 = vmatprep.mubr.bf16.mxu0 0
      %1006 = vmatmul.mubr.bf16.gmra.mxu0 %v950
      %v1007 = vpop.f32.mrf.mxu0
      %v1008 = vadd.f32 0.0, %v1007
      %v1009 = vpop.f32.mrf.mxu0
      %v1010 = vadd.f32 0.0, %v1009
      %v1011 = vpop.f32.mrf.mxu0
      %v1012 = vadd.f32 0.0, %v1011
      %v1013 = vpop.f32.mrf.mxu0
      %v1014 = vadd.f32 0.0, %v1013
      %1015 = vmatprep.mubr.bf16.mxu0 0
      %1016 = vmatmul.mubr.bf16.gmra.mxu0 %v953
      %v1017 = vpop.f32.mrf.mxu0
      %v1018 = vadd.f32 0.0, %v1017
      %v1019 = vpop.f32.mrf.mxu0
      %v1020 = vadd.f32 0.0, %v1019
      %v1021 = vpop.f32.mrf.mxu0
      %v1022 = vadd.f32 0.0, %v1021
      %v1023 = vpop.f32.mrf.mxu0
      %v1024 = vadd.f32 0.0, %v1023
      %1025 = vmatprep.mubr.bf16.mxu0 0
      %1026 = vmatmul.mubr.bf16.gmra.mxu0 %v956
      %v1027 = vpop.f32.mrf.mxu0
      %v1028 = vadd.f32 0.0, %v1027
      %v1029 = vpop.f32.mrf.mxu0
      %v1030 = vadd.f32 0.0, %v1029
      %v1031 = vpop.f32.mrf.mxu0
      %v1032 = vadd.f32 0.0, %v1031
      %v1033 = vpop.f32.mrf.mxu0
      %v1034 = vadd.f32 0.0, %v1033
      %1035 = vmatprep.mubr.bf16.mxu0 0
      %1036 = vmatmul.mubr.bf16.gmra.mxu0 %v959
      %v1037 = vpop.f32.mrf.mxu0
      %v1038 = vadd.f32 0.0, %v1037
      %v1039 = vpop.f32.mrf.mxu0
      %v1040 = vadd.f32 0.0, %v1039
      %v1041 = vpop.f32.mrf.mxu0
      %v1042 = vadd.f32 0.0, %v1041
      %v1043 = vpop.f32.mrf.mxu0
      %v1044 = vadd.f32 0.0, %v1043
      %1045 = vmatprep.mubr.bf16.mxu0 0
      %1046 = vmatmul.mubr.bf16.gmra.mxu0 %v962
      %v1047 = vpop.f32.mrf.mxu0
      %v1048 = vadd.f32 0.0, %v1047
      %v1049 = vpop.f32.mrf.mxu0
      %v1050 = vadd.f32 0.0, %v1049
      %v1051 = vpop.f32.mrf.mxu0
      %v1052 = vadd.f32 0.0, %v1051
      %v1053 = vpop.f32.mrf.mxu0
      %v1054 = vadd.f32 0.0, %v1053
      %1055 = vmatprep.mubr.bf16.mxu0 0
      %1056 = vmatmul.mubr.bf16.gmra.mxu0 %v965
      %v1057 = vpop.f32.mrf.mxu0
      %v1058 = vadd.f32 0.0, %v1057
      %v1059 = vpop.f32.mrf.mxu0
      %v1060 = vadd.f32 0.0, %v1059
      %v1061 = vpop.f32.mrf.mxu0
      %v1062 = vadd.f32 0.0, %v1061
      %v1063 = vpop.f32.mrf.mxu0
      %v1064 = vadd.f32 0.0, %v1063
      %1065 = vmatprep.mubr.bf16.mxu0 0
      %1066 = vmatmul.mubr.bf16.gmra.mxu0 %v968
      %v1067 = vpop.f32.mrf.mxu0
      %v1068 = vadd.f32 0.0, %v1067
      %v1069 = vpop.f32.mrf.mxu0
      %v1070 = vadd.f32 0.0, %v1069
      %v1071 = vpop.f32.mrf.mxu0
      %v1072 = vadd.f32 0.0, %v1071
      %v1073 = vpop.f32.mrf.mxu0
      %v1074 = vadd.f32 0.0, %v1073
      %1075 = vmatprep.mubr.bf16.mxu0 0
      %1076 = vmatmul.mubr.bf16.gmra.mxu0 %v971
      %v1077 = vpop.f32.mrf.mxu0
      %v1078 = vadd.f32 0.0, %v1077
      %v1079 = vpop.f32.mrf.mxu0
      %v1080 = vadd.f32 0.0, %v1079
      %v1081 = vpop.f32.mrf.mxu0
      %v1082 = vadd.f32 0.0, %v1081
      %v1083 = vpop.f32.mrf.mxu0
      %v1084 = vadd.f32 0.0, %v1083
      %1085 = vdwg.mxu0
      %v1086 = vmul.f32 %v1008, %v1048
      %v1087 = vmul.f32 %v1010, %v1050
      %v1088 = vmul.f32 %v1012, %v1052
      %v1089 = vmul.f32 %v1014, %v1054
      %v1090 = vmul.f32 %v1018, %v1058
      %v1091 = vmul.f32 %v1020, %v1060
      %v1092 = vmul.f32 %v1022, %v1062
      %v1093 = vmul.f32 %v1024, %v1064
      %v1094 = vmul.f32 %v1028, %v1068
      %v1095 = vmul.f32 %v1030, %v1070
      %v1096 = vmul.f32 %v1032, %v1072
      %v1097 = vmul.f32 %v1034, %v1074
      %v1098 = vmul.f32 %v1038, %v1078
      %v1099 = vmul.f32 %v1040, %v1080
      %v1100 = vmul.f32 %v1042, %v1082
      %v1101 = vmul.f32 %v1044, %v1084
      %v1102 = vadd.f32 %v1086, %v1094
      %v1103 = vadd.f32 %v1087, %v1095
      %v1104 = vadd.f32 %v1088, %v1096
      %v1105 = vadd.f32 %v1089, %v1097
      %v1106 = vadd.f32 %v1090, %v1098
      %v1107 = vadd.f32 %v1091, %v1099
      %v1108 = vadd.f32 %v1092, %v1100
      %v1109 = vadd.f32 %v1093, %v1101
      %v1110 = vmul.f32 %v274, %v1102
      %v1111 = vmul.f32 %v275, %v1103
      %v1112 = vmul.f32 %v276, %v1104
      %v1113 = vmul.f32 %v277, %v1105
      %v1114 = vmul.f32 %v278, %v1106
      %v1115 = vmul.f32 %v279, %v1107
      %v1116 = vmul.f32 %v280, %v1108
      %v1117 = vmul.f32 %v281, %v1109
      %v1118 = vadd.f32 %v1110, %v282
      %v1119 = vadd.f32 %v1111, %v283
      %v1120 = vadd.f32 %v1112, %v284
      %v1121 = vadd.f32 %v1113, %v285
      %v1122 = vadd.f32 %v1114, %v286
      %v1123 = vadd.f32 %v1115, %v287
      %v1124 = vadd.f32 %v1116, %v288
      %v1125 = vadd.f32 %v1117, %v289
      %1126 = vst [vmem:[%s271] sm:$0xff] %v1118
      %1127 = vst [vmem:[%s271 + $0x8] sm:$0xff] %v1119
      %1128 = vst [vmem:[%s271 + $0x10] sm:$0xff] %v1120
      %1129 = vst [vmem:[%s271 + $0x18] sm:$0xff] %v1121
      %1130 = vst [vmem:[%s271 + $0x20] sm:$0xff] %v1122
      %1131 = vst [vmem:[%s271 + $0x28] sm:$0xff] %v1123
      %1132 = vst [vmem:[%s271 + $0x30] sm:$0xff] %v1124
      %1133 = vst [vmem:[%s271 + $0x38] sm:$0xff] %v1125
      %p1134 = scmp.lt.s32.totalorder %s17, 1
      %s1135 = scalar_select %p1134, %s17, 1
      %s1136 = smul.addr %s1135, 8
      %s1137 = smul.addr %s1136, 8
      %s1138 = scalar_lea.vmem %s6, %s1137
      // Predicated region
      $region45: #{_fuse_block_ca_v3_impl.1} parent=43 // pred_check
        %p1139 = pneg %p171
      $region46: #{_fuse_block_ca_v3_impl.1} parent=43 // pred_check_branch
        %1141 = sbr.rel (%p1139) target = $region48
      $region47: #{_fuse_block_ca_v3_impl.1} parent=43 // pred_region
        _
      $region48: #{_fuse_block_ca_v3_impl.1} parent=43 // pred_fallthru
        _
    $region44: #{_fuse_block_ca_v3_impl.1} parent=5 // pred_fallthru
      _
    %p1142 = scmp.le.s32.totalorder 2, %s12
    // Predicated region
    $region49: #{_fuse_block_ca_v3_impl.1} parent=5 // pred_check
      %p1143 = pneg %p1142
    $region50: #{_fuse_block_ca_v3_impl.1} parent=5 // pred_check_branch
      %1145 = sbr.rel (%p1143) target = $region52
    $region51: #{_fuse_block_ca_v3_impl.1} parent=5 // pred_region
      %s1146 = ssub.s32 %s12, 2
      // Predicated region
      $region53: #{_fuse_block_ca_v3_impl.1} parent=51 // pred_check
        %p1147 = pneg %p177
      $region54: #{_fuse_block_ca_v3_impl.1} parent=51 // pred_check_branch
        %1149 = sbr.rel (%p1147) target = $region56
      $region55: #{_fuse_block_ca_v3_impl.1} parent=51 // pred_region
        %p1150 = scmp.lt.s32.totalorder %s18, 1
        %s1151 = scalar_select %p1150, %s18, 1
        %s1152 = smul.addr %s1151, 8
        %s1153 = smul.addr %s1152, 8
        %s1154 = scalar_lea.vmem %s6, %s1153
      $region56: #{_fuse_block_ca_v3_impl.1} parent=51 // pred_fallthru
        _
    $region52: #{_fuse_block_ca_v3_impl.1} parent=5 // pred_fallthru
      _
  $region6: #{_fuse_block_ca_v3_impl.1} parent=0 // loop_footer
    %s16 = sadd.s32 1, %s12
  $region7: #{_fuse_block_ca_v3_impl.1} parent=0 // loop_footer_branch
    %11 = sbr.rel target = $region3
  $region8: #{_fuse_block_ca_v3_impl.1} parent=0 // loop_exit
    _

</llo_original>
